<compile_context>
chip_gen: v7x
topology: tpu7x:2x2x1
jax: 0.10.0
libtpu: 0.0.40
codegen_flags: <defaults>
</compile_context>

<pallas_src>
import math
from functools import partial

import jax
import jax.numpy as jnp
from jax.experimental import pallas as pl
from jax.experimental.pallas import tpu as pltpu


_LANES = 512                     # lane-dense last dim (multiple of 128)
_TARGET_BLOCK_BYTES = 4 << 20    # ~4 MiB streaming blocks (amortize step overhead)
_PE_SLAB_ROWS = 512              # pos_emb generated in row slabs of this size


# ---------------------------------------------------------------------------
# Kernel 1: x * x_scale over a lane-dense 2-D view (pure HBM-bound stream).
# ---------------------------------------------------------------------------
def _scale_kernel(x_ref, o_ref, *, x_scale):
    o_ref[...] = x_ref[...] * x_scale


# ---------------------------------------------------------------------------
# Kernel 2: relative positional-encoding table, one row slab per grid step.
#   pe[m, 2j]   = sin((T-1-m) * div_j)
#   pe[m, 2j+1] = cos((T-1-m) * div_j),  div_j = exp(-2j * ln(10000)/H)
# ---------------------------------------------------------------------------
def _pe_kernel(pe_ref, *, time_len, hidden, slab_rows):
    rows, h = pe_ref.shape
    # Per-column inverse frequency / parity, computed on a single (1, H) row.
    col = jax.lax.broadcasted_iota(jnp.int32, (1, h), 1)
    col_even = (col - (col % 2)).astype(jnp.float32)
    inv_freq = jnp.exp(col_even * jnp.float32(-math.log(10000.0) / hidden))
    is_odd = (col % 2) == 1
    # Relative position per row: rel(m) = (T-1) - m, m = global row index.
    row0 = (pl.program_id(0) * slab_rows).astype(jnp.float32)
    row = jax.lax.broadcasted_iota(jnp.float32, (rows, h), 0) + row0
    angle = (jnp.float32(time_len - 1) - row) * inv_freq
    # even cols -> sin, odd cols -> cos.  Explicit cos (no phase-shift trick):
    # EUP has slack here and accuracy is better for long max_len.
    pe_ref[...] = jnp.where(is_odd, jnp.cos(angle), jnp.sin(angle)).astype(pe_ref.dtype)


def _lane_dense_layout(n_elems, itemsize):
    """Choose (rows, block_rows, grid) for a lane-dense (rows, _LANES) view."""
    rows = pl.cdiv(n_elems, _LANES)
    target_rows = max(8, (_TARGET_BLOCK_BYTES // (itemsize * _LANES)) // 8 * 8)
    if rows <= target_rows:
        return rows, rows, 1                       # single full-extent block
    return rows, target_rows, pl.cdiv(rows, target_rows)


def relative_positional_encoding(x, *, dropout_p=0.0, scale=None, scaled=False):
    """Pallas implementation of RelativePositionalEncoding.forward (eval mode).

    Args:
      x: (batch, time, hidden) array; hidden must be even (as in the module).
    Returns:
      (x_scaled, pos_emb) with shapes (B, T, H) and (1, 2T-1, H).
    """
    B, T, H = x.shape
    assert H % 2 == 0, "hidden_channels must be even (the PyTorch module requires it too)"
    if scaled:
        # TODO(synk): learnable x_scale parameter (scaled=True); using its init value 1.0.
        x_scale = 1.0
    else:
        x_scale = float(math.sqrt(H)) if scale is None else float(scale)
    # TODO(synk): stochastic dropout (pltpu.prng_*) not implemented for dropout_p > 0
    # (p == 0 / eval-mode dropout is identity).

    # ---- x * x_scale: lane-dense streaming kernel (fully parallel grid) ----
    n = B * T * H
    rows, block_rows, grid_x = _lane_dense_layout(n, x.dtype.itemsize)
    n_pad = rows * _LANES
    x_flat = x.reshape(-1)
    if n_pad != n:  # pad so every shape stays on the tiled lane-dense fast path
        x_flat = jnp.pad(x_flat, (0, n_pad - n))
    x2d = x_flat.reshape(rows, _LANES)

    block_bytes = block_rows * _LANES * x.dtype.itemsize
    # in + out, double-buffered, plus slack.  Explicit so ~4 MiB blocks also fit
    # under v5e's 16 MiB default scoped-VMEM limit (and well inside v7x's 64 MiB).
    vmem_limit = int(max(4 * block_bytes + (2 << 20), 16 << 20))

    x_scaled2d = pl.pallas_call(
        partial(_scale_kernel, x_scale=x_scale),
        out_shape=jax.ShapeDtypeStruct((rows, _LANES), x.dtype),
        grid=(grid_x,),
        in_specs=[pl.BlockSpec((block_rows, _LANES), lambda i: (i, 0))],
        out_specs=pl.BlockSpec((block_rows, _LANES), lambda i: (i, 0)),
        compiler_params=pltpu.CompilerParams(
            dimension_semantics=("parallel",),     # megacore-shardable on v7x
            vmem_limit_bytes=vmem_limit,
        ),
    )(x2d)
    x_scaled = x_scaled2d.reshape(-1)[:n].reshape(B, T, H)

    # ---- pos_emb table: tiny separate kernel, tiled over row slabs ---------
    P = 2 * T - 1
    P_pad = ((P + 7) // 8) * 8                     # sublane multiple; slice outside
    slab = min(_PE_SLAB_ROWS, P_pad)               # multiple of 8 (or full extent)
    grid_p = pl.cdiv(P_pad, slab)

    pe_pad = pl.pallas_call(
        partial(_pe_kernel, time_len=T, hidden=H, slab_rows=slab),
        out_shape=jax.ShapeDtypeStruct((P_pad, H), x.dtype),
        grid=(grid_p,),
        out_specs=pl.BlockSpec((slab, H), lambda i: (i, 0)),
        compiler_params=pltpu.CompilerParams(
            dimension_semantics=("parallel",),     # disjoint row slabs per step
        ),
    )()
    pos_emb = pe_pad[:P][None]                     # (1, 2T-1, H), wrapper-side glue

    return x_scaled, pos_emb


def _reference(x):
    """Pure-JAX reference for correctness check."""
    B, T, H = x.shape
    x_out = x * math.sqrt(H)
    m = jnp.arange(2 * T - 1, dtype=jnp.float32)[:, None]
    rel = (T - 1) - m
    j = jnp.arange(0, H, 2, dtype=jnp.float32)
    div = jnp.exp(j * (-math.log(10000.0) / H))
    pe = jnp.zeros((2 * T - 1, H), dtype=jnp.float32)
    pe = pe.at[:, 0::2].set(jnp.sin(rel * div))
    pe = pe.at[:, 1::2].set(jnp.cos(rel * div))
    return x_out, pe[None]


if __name__ == "__main__":
    B, T, H = 2, 8, 32  # (batch, time, hidden_channels)
    key = jax.random.PRNGKey(0)
    x = jax.random.normal(key, (B, T, H), dtype=jnp.float32)

    x_out, pos_emb = relative_positional_encoding(x)
    x_out = jax.block_until_ready(x_out)
    pos_emb = jax.block_until_ready(pos_emb)

    x_ref, pe_ref = _reference(x)
    assert x_out.shape == (B, T, H) and pos_emb.shape == (1, 2 * T - 1, H)
    assert jnp.allclose(x_out, x_ref, atol=1e-5, rtol=1e-5)
    assert jnp.allclose(pos_emb, pe_ref, atol=1e-4, rtol=1e-4)

    print("KERNEL_OK")
</pallas_src>

<mosaic_0001>
module attributes {stable_mosaic.version = 11 : i64} {
  func.func @_scale_kernel(%arg0: i32, %arg1: memref<1x512xf32, #tpu.memory_space<vmem>>, %arg2: memref<1x512xf32, #tpu.memory_space<vmem>>) attributes {dimension_semantics = [#tpu.dimension_semantics<parallel>], iteration_bounds = array<i64: 1>, scalar_prefetch = 0 : i64, scratch_operands = 0 : i64, tpu.core_type = #tpu.core_type<tc>, window_params = [{transform_indices = @transform_0, window_bounds = array<i64: 1, 512>}, {transform_indices = @transform_1, window_bounds = array<i64: 1, 512>}]} {
    %c0 = arith.constant 0 : index
    %c0_0 = arith.constant 0 : index
    %0 = vector.load %arg1[%c0, %c0_0] : memref<1x512xf32, #tpu.memory_space<vmem>>, vector<1x512xf32>
    %cst = arith.constant 5.65685415 : f32
    %1 = vector.broadcast %cst : f32 to vector<1x512xf32>
    %2 = arith.mulf %0, %1 : vector<1x512xf32>
    %c0_1 = arith.constant 0 : index
    %c0_2 = arith.constant 0 : index
    %3 = vector.load %arg2[%c0_1, %c0_2] : memref<1x512xf32, #tpu.memory_space<vmem>>, vector<1x512xf32>
    tpu.vector_store %arg2[%c0_1, %c0_2], %2 {strides = array<i32>} : memref<1x512xf32, #tpu.memory_space<vmem>>, vector<1x512xf32>,
    return
  }
  func.func @transform_0(%arg0: i32) -> (i32, i32) {
    %c0_i32 = arith.constant 0 : i32
    %c0_i32_0 = arith.constant 0 : i32
    return %arg0, %c0_i32 : i32, i32
  }
  func.func @transform_1(%arg0: i32) -> (i32, i32) {
    %c0_i32 = arith.constant 0 : i32
    %c0_i32_0 = arith.constant 0 : i32
    return %arg0, %c0_i32 : i32, i32
  }
}

</mosaic_0001>

<llo_original>
// kernel: tpu_custom_call.1
$region0: #{tpu_custom_call.1}
  #allocation0 [shape = 'u32[]', space=smem, size = 0x4, offset = 0x4, fixed_abs, tag = 'smem constant byte address 0x4 - core index']
  #allocation1 [shape = 'u32[144,128]{1,0:T(1,128)}', space=vmem, size = 0x12000, scoped, tag = 'internal scratch']
  %s0 = inlined_call_operand.hbm [shape: f32[1,512], index: 0, kind: input, shape index: {}]
  %s1 = inlined_call_operand.hbm [shape: f32[1,512], index: 1, kind: output, shape index: {}]
  %s2 = sld [smem:[#allocation0]]
  $region18: #{tpu_custom_call.1} parent=0
    _
  %s4 = ssub.s32 1, %s2
  %s5 = scalar_select 0, %s4, %s2
  $region1: #{tpu_custom_call.1} parent=0
    #allocation2 [shape = 'u8[2048]{0}', space=vmem, size = 0x800, scoped, tag = 'input window, operand 0, single buffered']
    #allocation3 [shape = 's32[1]{0}', space=sflag, size = 0x4, scoped, tag = 'scoped memory for tpu_custom_call.1']
    #allocation4 [shape = 's32[1]{0}', space=sflag, size = 0x4, scoped, tag = 'scoped memory for tpu_custom_call.1']
    #allocation5 [shape = 'u8[2048]{0}', space=vmem, size = 0x800, scoped, tag = 'output window, operand 0, single buffered']
    %6 = vsyncpa [#allocation3], 0
    %7 = vsyncpa [#allocation4], 0
    // Predicated region
    $region2: #{tpu_custom_call.1} parent=1 // pred_check
      _
    $region3: #{tpu_custom_call.1} parent=1 // pred_check_branch
      %9 = sbr.rel (0) target = $region5
    $region4: #{tpu_custom_call.1} parent=1 // pred_region
      %s11 = ssub.s32 64, 64
      %12 = vsyncadd [#allocation3], %s11
      %s14 = sshll.u32 [#allocation2], 4
      %s15 = int_to_ptr.vmem [resolvable:$true] %s14
      %17 = dma.hbm_to_vmem [thread:$0]  %s0, 64, %s15, [#allocation3]
    $region5: #{tpu_custom_call.1} parent=1 // pred_fallthru
      _
    // Predicated region
    $region6: #{tpu_custom_call.1} parent=1 // pred_check
      _
    $region7: #{tpu_custom_call.1} parent=1 // pred_check_branch
      %19 = sbr.rel (0) target = $region9
    $region8: #{tpu_custom_call.1} parent=1 // pred_region
      %20 = dma.done [#allocation3], 64
    $region9: #{tpu_custom_call.1} parent=1 // pred_fallthru
      _
    %v21 = vld [vmem:[#allocation2] sm:$0xf]
    %v22 = vmul.f32 %v21, 5.656854
    %v23 = vlaneseq
    %vm24 = vcmp.ge.s32.totalorder %v23, 0
    %vm25 = vcmp.lt.s32.totalorder %v23, 512
    %vm26 = vmand %vm24, %vm25
    %27 = vst.msk [vmem:[#allocation5] sm:$0xf] %vm26, %v22
    // Predicated region
    $region10: #{tpu_custom_call.1} parent=1 // pred_check
      _
    $region11: #{tpu_custom_call.1} parent=1 // pred_check_branch
      %29 = sbr.rel (0) target = $region13
    $region12: #{tpu_custom_call.1} parent=1 // pred_region
      %s31 = ssub.s32 64, 64
      %32 = vsyncadd [#allocation4], %s31
      %s34 = sshll.u32 [#allocation5], 4
      %s35 = int_to_ptr.vmem [resolvable:$true] %s34
      %37 = dma.vmem_to_hbm [thread:$0]  %s35, 64, %s1, [#allocation4]
    $region13: #{tpu_custom_call.1} parent=1 // pred_fallthru
      _
    // Predicated region
    $region14: #{tpu_custom_call.1} parent=1 // pred_check
      _
    $region15: #{tpu_custom_call.1} parent=1 // pred_check_branch
      %39 = sbr.rel (0) target = $region17
    $region16: #{tpu_custom_call.1} parent=1 // pred_region
      %40 = dma.done [#allocation4], 64
    $region17: #{tpu_custom_call.1} parent=1 // pred_fallthru
      _
    %41 = vsyncpa [#allocation3], 1
    %42 = vsyncpa [#allocation4], 1

</llo_original>
